<compile_context>
chip_gen: v5e
topology: v5e:2x2
jax: 0.10.0
libtpu: 0.0.40
codegen_flags: <defaults>
</compile_context>

<pallas_src>
import jax
import jax.numpy as jnp
from jax.experimental import pallas as pl
from jax.experimental.pallas import tpu as pltpu

EPS = 1e-6
_LANE = 128


def _conv1x1_ln_kernel(x_ref, p_ref, o_ref):
    # x_ref: (1, C_in, TN)   pixel tile: channels on sublanes, pixels on lanes
    # p_ref: (C_out, C_in+3) packed [conv_w | conv_b | gamma | beta]
    # o_ref: (1, C_out, TN)
    x = x_ref[0].astype(jnp.float32)            # (C_in, TN)
    p = p_ref[...].astype(jnp.float32)          # (C_out, C_in + 3)

    c_in = x.shape[0]
    w = p[:, :c_in]                             # (C_out, C_in)
    b = p[:, c_in:c_in + 1]                     # (C_out, 1)
    g = p[:, c_in + 1:c_in + 2]                 # (C_out, 1)
    beta = p[:, c_in + 2:c_in + 3]              # (C_out, 1)

    # 1x1 conv as VPU broadcast FMAs: y[c, n] = sum_k w[c, k] * x[k, n] + b[c]
    y = w[:, 0:1] * x[0:1, :]
    for k in range(1, c_in):
        y = y + w[:, k:k + 1] * x[k:k + 1, :]
    y = y + b                                   # (C_out, TN)

    # LayerNorm over the channel (sublane) axis — unrolled sublane adds.
    c_out = y.shape[0]
    inv_c = 1.0 / c_out
    s = y[0:1, :]
    for c in range(1, c_out):
        s = s + y[c:c + 1, :]
    mean = s * inv_c                            # (1, TN)

    d = y - mean                                # (C_out, TN)
    sq = d * d
    s2 = sq[0:1, :]
    for c in range(1, c_out):
        s2 = s2 + sq[c:c + 1, :]
    var = s2 * inv_c                            # (1, TN), biased variance

    y_norm = d * jax.lax.rsqrt(var + EPS)
    o_ref[0] = (y_norm * g + beta).astype(o_ref.dtype)


def _vmem_capacity_bytes():
    try:
        return int(pltpu.get_tpu_info().vmem_capacity_bytes)
    except Exception:
        return 64 << 20                          # conservative (v7x-sized) fallback


def _pick_pixel_tile(hw, batches):
    """Lane-aligned pixel tile sized from the per-generation VMEM budget."""
    if hw < _LANE:
        return hw                                # tiny input: full row (full-dim rule)
    # Per buffer: (4 -> 8 padded sublanes) x TN lanes x 4 B; x2 (in+out) x2 (double buf)
    bytes_per_px = 128
    budget = min(_vmem_capacity_bytes() // 3, 40 << 20)   # headroom for pipeline/scratch
    tn = (budget // bytes_per_px) // _LANE * _LANE
    tn = max(_LANE, min(tn, 256 * 1024))         # hard cap ~32 MiB of buffers
    tn = min(tn, (hw // _LANE) * _LANE)          # never exceed the lane-floored row
    # Keep >= 8 grid steps so v7x's two TensorCores both get work and the
    # double-buffer pipeline has something to overlap.
    while tn > _LANE and batches * pl.cdiv(hw, tn) < 8:
        tn = max(_LANE, (tn // 2) // _LANE * _LANE)
    return tn


def bug2_forward(x_nchw, conv_w, conv_b, ln_gamma, ln_beta):
    """x_nchw: (B, C_in, H, W) float32. Returns (B, H, W, C_out) float32."""
    B, C_in, H, W = x_nchw.shape
    C_out = conv_w.shape[0]
    HW = H * W

    # Metadata-only reshape — kernel consumes NCHW directly (no transpose pass).
    x3 = x_nchw.reshape(B, C_in, HW)

    # Pack conv weight + bias + LN affine into one tiny grid-invariant operand.
    w_mat = conv_w.reshape(C_out, C_in).astype(jnp.float32)
    params = jnp.concatenate(
        [
            w_mat,
            conv_b.reshape(C_out, 1).astype(jnp.float32),
            ln_gamma.reshape(C_out, 1).astype(jnp.float32),
            ln_beta.reshape(C_out, 1).astype(jnp.float32),
        ],
        axis=1,
    )                                            # (C_out, C_in + 3)

    TN = _pick_pixel_tile(HW, B)
    grid = (B, pl.cdiv(HW, TN))                  # ragged last block is masked

    # Double-buffered in+out tiles, 4->8 sublane padding, f32.
    vmem_needed = 2 * 2 * 8 * TN * 4
    vmem_limit = int(min(48 << 20, max(32 << 20, vmem_needed + (8 << 20))))

    cost = pl.CostEstimate(
        flops=60 * B * HW,                       # ~32 conv + ~28 LN VPU ops per pixel
        transcendentals=B * HW,                  # one rsqrt per pixel
        bytes_accessed=2 * B * C_in * HW * 4,    # one read + one write pass
    )

    out_cfirst = pl.pallas_call(
        _conv1x1_ln_kernel,
        out_shape=jax.ShapeDtypeStruct((B, C_out, HW), x_nchw.dtype),
        grid_spec=pltpu.PrefetchScalarGridSpec(
            num_scalar_prefetch=0,
            grid=grid,
            in_specs=[
                pl.BlockSpec((1, C_in, TN), lambda b, i: (b, 0, i)),
                pl.BlockSpec((C_out, C_in + 3), lambda b, i: (0, 0)),
            ],
            out_specs=pl.BlockSpec((1, C_out, TN), lambda b, i: (b, 0, i)),
        ),
        compiler_params=pltpu.CompilerParams(
            dimension_semantics=("parallel", "parallel"),
            vmem_limit_bytes=vmem_limit,
        ),
        cost_estimate=cost,
    )(x3, params)

    # Final NHWC permute, matches permute(0,2,3,1).
    # TODO(synk): in-kernel NHWC store needs a C=4 lane interleave with no
    # robust Mosaic lowering; kept as a single XLA transpose pass instead.
    return jnp.transpose(out_cfirst.reshape(B, C_out, H, W), (0, 2, 3, 1))


def _reference(x_nchw, conv_w, conv_b, ln_gamma, ln_beta):
    # Pure-JAX reference matching the PyTorch module.
    B, C_in, H, W = x_nchw.shape
    C_out = conv_w.shape[0]
    x_nhwc = jnp.transpose(x_nchw, (0, 2, 3, 1))
    y = jnp.einsum("bhwc,oc->bhwo", x_nhwc, conv_w.reshape(C_out, C_in)) + conv_b
    mean = jnp.mean(y, axis=-1, keepdims=True)
    var = jnp.mean(jnp.square(y - mean), axis=-1, keepdims=True)
    return (y - mean) * jax.lax.rsqrt(var + EPS) * ln_gamma + ln_beta


if __name__ == "__main__":
    key = jax.random.PRNGKey(0)
    k_x, k_w, k_b, k_g, k_be = jax.random.split(key, 5)

    B, C_in, C_out, H, W = 2, 4, 4, 16, 16

    # Deterministic synthetic parameters (shapes match nn.Conv2d / nn.LayerNorm).
    x = jax.random.normal(k_x, (B, C_in, H, W), dtype=jnp.float32)
    conv_w = jax.random.normal(k_w, (C_out, C_in, 1, 1), dtype=jnp.float32) * 0.5
    conv_b = jax.random.normal(k_b, (C_out,), dtype=jnp.float32) * 0.1
    ln_gamma = 1.0 + 0.1 * jax.random.normal(k_g, (C_out,), dtype=jnp.float32)
    ln_beta = 0.1 * jax.random.normal(k_be, (C_out,), dtype=jnp.float32)

    out = bug2_forward(x, conv_w, conv_b, ln_gamma, ln_beta)
    out = jax.block_until_ready(out)

    ref = _reference(x, conv_w, conv_b, ln_gamma, ln_beta)
    assert out.shape == (B, H, W, C_out), out.shape
    assert jnp.allclose(out, ref, atol=1e-4, rtol=1e-4), "mismatch vs reference"

    print("KERNEL_OK")
</pallas_src>

<mosaic_0001>
module attributes {stable_mosaic.version = 11 : i64} {
  func.func @_conv1x1_ln_kernel(%arg0: i32, %arg1: i32, %arg2: memref<1x4x128xf32, #tpu.memory_space<vmem>>, %arg3: memref<4x7xf32, #tpu.memory_space<vmem>>, %arg4: memref<1x4x128xf32, #tpu.memory_space<vmem>>) attributes {dimension_semantics = [#tpu.dimension_semantics<parallel>, #tpu.dimension_semantics<parallel>], iteration_bounds = array<i64: 2, 2>, scalar_prefetch = 0 : i64, scratch_operands = 0 : i64, tpu.core_type = #tpu.core_type<tc>, window_params = [{transform_indices = @transform_0, window_bounds = array<i64: 1, 4, 128>}, {pipeline_mode = #tpu.pipeline_mode<synchronous>, transform_indices = @transform_1, window_bounds = array<i64: 4, 7>}, {transform_indices = @transform_2, window_bounds = array<i64: 1, 4, 128>}]} {
    %c0 = arith.constant 0 : index
    %c0_0 = arith.constant 0 : index
    %c0_1 = arith.constant 0 : index
    %0 = vector.load %arg2[%c0, %c0_0, %c0_1] : memref<1x4x128xf32, #tpu.memory_space<vmem>>, vector<1x4x128xf32>
    %1 = vector.shape_cast %0 : vector<1x4x128xf32> to vector<4x128xf32>
    %c0_2 = arith.constant 0 : index
    %c0_3 = arith.constant 0 : index
    %2 = vector.load %arg3[%c0_2, %c0_3] : memref<4x7xf32, #tpu.memory_space<vmem>>, vector<4x7xf32>
    %3 = vector.extract_strided_slice %2 {offsets = [0, 0], sizes = [4, 4], strides = [1, 1]} : vector<4x7xf32> to vector<4x4xf32>
    %4 = vector.extract_strided_slice %2 {offsets = [0, 4], sizes = [4, 1], strides = [1, 1]} : vector<4x7xf32> to vector<4x1xf32>
    %5 = vector.extract_strided_slice %2 {offsets = [0, 5], sizes = [4, 1], strides = [1, 1]} : vector<4x7xf32> to vector<4x1xf32>
    %6 = vector.extract_strided_slice %2 {offsets = [0, 6], sizes = [4, 1], strides = [1, 1]} : vector<4x7xf32> to vector<4x1xf32>
    %7 = vector.extract_strided_slice %3 {offsets = [0, 0], sizes = [4, 1], strides = [1, 1]} : vector<4x4xf32> to vector<4x1xf32>
    %8 = vector.extract_strided_slice %1 {offsets = [0, 0], sizes = [1, 128], strides = [1, 1]} : vector<4x128xf32> to vector<1x128xf32>
    %9 = vector.broadcast %7 : vector<4x1xf32> to vector<4x128xf32>
    %10 = vector.broadcast %8 : vector<1x128xf32> to vector<4x128xf32>
    %11 = arith.mulf %9, %10 : vector<4x128xf32>
    %12 = vector.extract_strided_slice %3 {offsets = [0, 1], sizes = [4, 1], strides = [1, 1]} : vector<4x4xf32> to vector<4x1xf32>
    %13 = vector.extract_strided_slice %1 {offsets = [1, 0], sizes = [1, 128], strides = [1, 1]} : vector<4x128xf32> to vector<1x128xf32>
    %14 = vector.broadcast %12 : vector<4x1xf32> to vector<4x128xf32>
    %15 = vector.broadcast %13 : vector<1x128xf32> to vector<4x128xf32>
    %16 = arith.mulf %14, %15 : vector<4x128xf32>
    %17 = arith.addf %11, %16 : vector<4x128xf32>
    %18 = vector.extract_strided_slice %3 {offsets = [0, 2], sizes = [4, 1], strides = [1, 1]} : vector<4x4xf32> to vector<4x1xf32>
    %19 = vector.extract_strided_slice %1 {offsets = [2, 0], sizes = [1, 128], strides = [1, 1]} : vector<4x128xf32> to vector<1x128xf32>
    %20 = vector.broadcast %18 : vector<4x1xf32> to vector<4x128xf32>
    %21 = vector.broadcast %19 : vector<1x128xf32> to vector<4x128xf32>
    %22 = arith.mulf %20, %21 : vector<4x128xf32>
    %23 = arith.addf %17, %22 : vector<4x128xf32>
    %24 = vector.extract_strided_slice %3 {offsets = [0, 3], sizes = [4, 1], strides = [1, 1]} : vector<4x4xf32> to vector<4x1xf32>
    %25 = vector.extract_strided_slice %1 {offsets = [3, 0], sizes = [1, 128], strides = [1, 1]} : vector<4x128xf32> to vector<1x128xf32>
    %26 = vector.broadcast %24 : vector<4x1xf32> to vector<4x128xf32>
    %27 = vector.broadcast %25 : vector<1x128xf32> to vector<4x128xf32>
    %28 = arith.mulf %26, %27 : vector<4x128xf32>
    %29 = arith.addf %23, %28 : vector<4x128xf32>
    %30 = vector.broadcast %4 : vector<4x1xf32> to vector<4x128xf32>
    %31 = arith.addf %29, %30 : vector<4x128xf32>
    %32 = vector.extract_strided_slice %31 {offsets = [0, 0], sizes = [1, 128], strides = [1, 1]} : vector<4x128xf32> to vector<1x128xf32>
    %33 = vector.extract_strided_slice %31 {offsets = [1, 0], sizes = [1, 128], strides = [1, 1]} : vector<4x128xf32> to vector<1x128xf32>
    %34 = arith.addf %32, %33 : vector<1x128xf32>
    %35 = vector.extract_strided_slice %31 {offsets = [2, 0], sizes = [1, 128], strides = [1, 1]} : vector<4x128xf32> to vector<1x128xf32>
    %36 = arith.addf %34, %35 : vector<1x128xf32>
    %37 = vector.extract_strided_slice %31 {offsets = [3, 0], sizes = [1, 128], strides = [1, 1]} : vector<4x128xf32> to vector<1x128xf32>
    %38 = arith.addf %36, %37 : vector<1x128xf32>
    %cst = arith.constant 2.500000e-01 : f32
    %39 = vector.broadcast %cst : f32 to vector<1x128xf32>
    %40 = arith.mulf %38, %39 : vector<1x128xf32>
    %41 = vector.broadcast %40 : vector<1x128xf32> to vector<4x128xf32>
    %42 = arith.subf %31, %41 : vector<4x128xf32>
    %43 = arith.mulf %42, %42 : vector<4x128xf32>
    %44 = vector.extract_strided_slice %43 {offsets = [0, 0], sizes = [1, 128], strides = [1, 1]} : vector<4x128xf32> to vector<1x128xf32>
    %45 = vector.extract_strided_slice %43 {offsets = [1, 0], sizes = [1, 128], strides = [1, 1]} : vector<4x128xf32> to vector<1x128xf32>
    %46 = arith.addf %44, %45 : vector<1x128xf32>
    %47 = vector.extract_strided_slice %43 {offsets = [2, 0], sizes = [1, 128], strides = [1, 1]} : vector<4x128xf32> to vector<1x128xf32>
    %48 = arith.addf %46, %47 : vector<1x128xf32>
    %49 = vector.extract_strided_slice %43 {offsets = [3, 0], sizes = [1, 128], strides = [1, 1]} : vector<4x128xf32> to vector<1x128xf32>
    %50 = arith.addf %48, %49 : vector<1x128xf32>
    %cst_4 = arith.constant 2.500000e-01 : f32
    %51 = vector.broadcast %cst_4 : f32 to vector<1x128xf32>
    %52 = arith.mulf %50, %51 : vector<1x128xf32>
    %cst_5 = arith.constant 9.99999997E-7 : f32
    %53 = vector.broadcast %cst_5 : f32 to vector<1x128xf32>
    %54 = arith.addf %52, %53 : vector<1x128xf32>
    %55 = math.rsqrt %54 : vector<1x128xf32>
    %56 = vector.broadcast %55 : vector<1x128xf32> to vector<4x128xf32>
    %57 = arith.mulf %42, %56 : vector<4x128xf32>
    %58 = vector.broadcast %5 : vector<4x1xf32> to vector<4x128xf32>
    %59 = arith.mulf %57, %58 : vector<4x128xf32>
    %60 = vector.broadcast %6 : vector<4x1xf32> to vector<4x128xf32>
    %61 = arith.addf %59, %60 : vector<4x128xf32>
    %c0_6 = arith.constant 0 : index
    %c0_7 = arith.constant 0 : index
    %c0_8 = arith.constant 0 : index
    %62 = vector.load %arg4[%c0_6, %c0_7, %c0_8] : memref<1x4x128xf32, #tpu.memory_space<vmem>>, vector<1x4x128xf32>
    %63 = vector.shape_cast %62 : vector<1x4x128xf32> to vector<4x128xf32>
    %64 = vector.shape_cast %61 : vector<4x128xf32> to vector<1x4x128xf32>
    tpu.vector_store %arg4[%c0_6, %c0_7, %c0_8], %64 {strides = array<i32>} : memref<1x4x128xf32, #tpu.memory_space<vmem>>, vector<1x4x128xf32>,
    return
  }
  func.func @transform_0(%arg0: i32, %arg1: i32) -> (i32, i32, i32) {
    %c0_i32 = arith.constant 0 : i32
    %c0_i32_0 = arith.constant 0 : i32
    return %arg0, %c0_i32, %arg1 : i32, i32, i32
  }
  func.func @transform_1(%arg0: i32, %arg1: i32) -> (i32, i32) {
    %c0_i32 = arith.constant 0 : i32
    %c0_i32_0 = arith.constant 0 : i32
    %c0_i32_1 = arith.constant 0 : i32
    return %c0_i32, %c0_i32_0 : i32, i32
  }
  func.func @transform_2(%arg0: i32, %arg1: i32) -> (i32, i32, i32) {
    %c0_i32 = arith.constant 0 : i32
    %c0_i32_0 = arith.constant 0 : i32
    return %arg0, %c0_i32, %arg1 : i32, i32, i32
  }
}

</mosaic_0001>

<llo_original>
// kernel: tpu_custom_call.1
$region0: #{tpu_custom_call.1}
  #allocation0 [shape = 'u32[]', space=smem, size = 0x4, offset = 0x4, fixed_abs, tag = 'smem constant byte address 0x4 - core index']
  #allocation1 [shape = 'u32[72,128]{1,0:T(1,128)}', space=vmem, size = 0x9000, scoped, tag = 'internal scratch']
  %s0 = inlined_call_operand.hbm [shape: f32[2,4,256], index: 0, kind: input, shape index: {}]
  %s1 = inlined_call_operand.hbm [shape: f32[4,7], index: 1, kind: input, shape index: {}]
  %s2 = inlined_call_operand.hbm [shape: f32[2,4,256], index: 2, kind: output, shape index: {}]
  %s3 = sld [smem:[#allocation0]]
  $region49: #{tpu_custom_call.1} parent=0
    _
  %s5 = ssub.s32 1, %s3
  %s6 = scalar_select 0, %s5, %s3
  $region1: #{tpu_custom_call.1} parent=0
    #allocation2 [shape = 'u8[4096]{0}', space=vmem, size = 0x1000, scoped, tag = 'input window, operand 0']
    #allocation3 [shape = 's32[2]{0}', space=sflag, size = 0x8, scoped, tag = 'scoped memory for tpu_custom_call.1']
    #allocation4 [shape = 's32[2]{0}', space=sflag, size = 0x8, scoped, tag = 'scoped memory for tpu_custom_call.1']
    #allocation5 [shape = 'u8[2048]{0}', space=vmem, size = 0x800, scoped, tag = 'input window, operand 1, single buffered']
    #allocation6 [shape = 's32[1]{0}', space=sflag, size = 0x4, scoped, tag = 'scoped memory for tpu_custom_call.1']
    #allocation7 [shape = 'u8[4096]{0}', space=vmem, size = 0x1000, scoped, tag = 'output window, operand 0']
    %7 = vsyncpa [#allocation3], 0
    %s8 = scalar_lea.sflag [#allocation3], 1
    %9 = vsyncpa %s8, 0
    %10 = vsyncpa [#allocation6], 0
    %11 = vsyncpa [#allocation4], 0
    %s12 = scalar_lea.sflag [#allocation4], 1
    %13 = vsyncpa %s12, 0
    loop: start=0, step=1, limit=6
    $region2: #{tpu_custom_call.1} parent=1 // loop_pre_header
      _
    $region3: #{tpu_custom_call.1} parent=1 // loop_header
      %s15 = sphi 0, %s19
      %p16 = scmp.ge.s32.totalorder %s15, 6
      %s22 = sphi 0, %s34
      %s23 = sphi 0, %s30
      %s24 = sphi 0, %s22
      %s25 = sphi 0, %s23
      %s26 = sphi 0, %s24
      %s27 = sphi 0, %s25
      %s39 = sphi 0, %s41
      %s42 = sphi 0, %s39
      %s43 = sphi 0, %s42
      %s59 = sphi 0, %s43
      %s63 = sphi 0, %s63
      %s65 = sphi 0, %s63
      %s66 = sphi 0, %s65
      %s80 = sphi 0, %s66
      %s88 = sphi 0, %s90
      %s91 = sphi 0, %s88
      %s92 = sphi 0, %s91
      %s108 = sphi 0, %s92
    $region4: #{tpu_custom_call.1} parent=1 // loop_header_branch
      %18 = sbr.rel (%p16) target = $region8
    $region5: #{tpu_custom_call.1} parent=1 // loop_body
      %s20 = ssub.s32 %s15, 1
      %s21 = ssub.s32 %s15, 2
      %s28 = sadd.s32 1, %s23
      %p29 = scmp.ge.s32.totalorder %s28, 2
      %s30 = scalar_select %p29, 0, %s28
      %s31 = sadd.s32 1, %s22
      %s32 = scalar_select %p29, %s31, %s22
      %p33 = scmp.ge.s32.totalorder %s32, 2
      %s34 = scalar_select %p33, 0, %s32
      %s35 = ssub.s32 %s22, %s34
      %s36 = ssub.s32 %s23, %s30
      %s37 = sor.u32 %s35, %s36
      %p38 = scmp.eq.s32.totalorder %s37, 0
      %s40 = sadd.s32 %s39, 1
      %s41 = scalar_select %p38, %s39, %s40
      %p44 = pneg %p38
      %p45 = scmp.eq.s32.totalorder %s15, 3
      %p46 = por %p44, %p45
      %p47 = scmp.ne.s32.totalorder %s39, %s42
      %p48 = scmp.eq.s32.totalorder %s15, 0
      %p49 = por %p47, %p48
      %p50 = scmp.ne.s32.totalorder %s39, %s42
      %p51 = scmp.eq.s32.totalorder %s20, 3
      %p52 = por %p50, %p51
      %p53 = scmp.ne.s32.totalorder %s42, %s43
      %p54 = scmp.eq.s32.totalorder %s20, 0
      %p55 = por %p53, %p54
      %p56 = scmp.ne.s32.totalorder %s42, %s43
      %p57 = scmp.eq.s32.totalorder %s21, 3
      %p58 = por %p56, %p57
      %p60 = scmp.ne.s32.totalorder %s43, %s59
      %p61 = scmp.eq.s32.totalorder %s21, 0
      %p62 = por %p60, %p61
      %s64 = sadd.s32 %s63, 1
      %p67 = scmp.eq.s32.totalorder %s15, 3
      %p68 = scmp.ne.s32.totalorder %s63, %s65
      %p69 = scmp.eq.s32.totalorder %s15, 0
      %p70 = por %p68, %p69
      %p71 = scmp.ne.s32.totalorder %s63, %s65
      %p72 = scmp.eq.s32.totalorder %s20, 3
      %p73 = por %p71, %p72
      %p74 = scmp.ne.s32.totalorder %s65, %s66
      %p75 = scmp.eq.s32.totalorder %s20, 0
      %p76 = por %p74, %p75
      %p77 = scmp.ne.s32.totalorder %s65, %s66
      %p78 = scmp.eq.s32.totalorder %s21, 3
      %p79 = por %p77, %p78
      %p81 = scmp.ne.s32.totalorder %s66, %s80
      %p82 = scmp.eq.s32.totalorder %s21, 0
      %p83 = por %p81, %p82
      %s84 = ssub.s32 %s22, %s34
      %s85 = ssub.s32 %s23, %s30
      %s86 = sor.u32 %s84, %s85
      %p87 = scmp.eq.s32.totalorder %s86, 0
      %s89 = sadd.s32 %s88, 1
      %s90 = scalar_select %p87, %s88, %s89
      %p93 = pneg %p87
      %p94 = scmp.eq.s32.totalorder %s15, 3
      %p95 = por %p93, %p94
      %p96 = scmp.ne.s32.totalorder %s88, %s91
      %p97 = scmp.eq.s32.totalorder %s15, 0
      %p98 = por %p96, %p97
      %p99 = scmp.ne.s32.totalorder %s88, %s91
      %p100 = scmp.eq.s32.totalorder %s20, 3
      %p101 = por %p99, %p100
      %p102 = scmp.ne.s32.totalorder %s91, %s92
      %p103 = scmp.eq.s32.totalorder %s20, 0
      %p104 = por %p102, %p103
      %p105 = scmp.ne.s32.totalorder %s91, %s92
      %p106 = scmp.eq.s32.totalorder %s21, 3
      %p107 = por %p105, %p106
      %p109 = scmp.ne.s32.totalorder %s92, %s108
      %p110 = scmp.eq.s32.totalorder %s21, 0
      %p111 = por %p109, %p110
      %p112 = scmp.le.s32.totalorder 1, %s15
      %p113 = scmp.lt.s32.totalorder %s15, 5
      %p114 = pnand %p112, %p113
      %p115 = pneg %p114
      // Predicated region
      $region9: #{tpu_custom_call.1} parent=5 // pred_check
        _
      $region10: #{tpu_custom_call.1} parent=5 // pred_check_branch
        %117 = sbr.rel (%p114) target = $region12
      $region11: #{tpu_custom_call.1} parent=5 // pred_region
        %s118 = ssub.s32 %s15, 1
        // Predicated region
        $region13: #{tpu_custom_call.1} parent=11 // pred_check
          %p119 = pneg %p76
        $region14: #{tpu_custom_call.1} parent=11 // pred_check_branch
          %121 = sbr.rel (%p119) target = $region16
        $region15: #{tpu_custom_call.1} parent=11 // pred_region
          %123 = vsyncadd [#allocation6], 0
          %s125 = sshll.u32 %s1, 4
          %s126 = int_to_ptr.hbm [resolvable:$true] %s125
          %s127 = sshll.u32 [#allocation5], 4
          %s128 = int_to_ptr.vmem [resolvable:$true] %s127
          %130 = dma.hbm_to_vmem [thread:$0]  %s126, 64, %s128, [#allocation6]
        $region16: #{tpu_custom_call.1} parent=11 // pred_fallthru
          _
      $region12: #{tpu_custom_call.1} parent=5 // pred_fallthru
        _
      %p131 = scmp.lt.s32.totalorder %s15, 4
      // Predicated region
      $region17: #{tpu_custom_call.1} parent=5 // pred_check
        %p132 = pneg %p131
      $region18: #{tpu_custom_call.1} parent=5 // pred_check_branch
        %134 = sbr.rel (%p132) target = $region20
      $region19: #{tpu_custom_call.1} parent=5 // pred_region
        // Predicated region
        $region21: #{tpu_custom_call.1} parent=19 // pred_check
          %p135 = pneg %p49
        $region22: #{tpu_custom_call.1} parent=19 // pred_check_branch
          %137 = sbr.rel (%p135) target = $region24
        $region23: #{tpu_custom_call.1} parent=19 // pred_region
          %s138 = sand.u32 %s39, 1
          %s139 = scalar_lea.sflag [#allocation3], %s138
          %s140 = sand.u32 %s39, 1
          %s141 = smul.addr %s140, 4
          %s142 = scalar_lea.vmem [#allocation2], %s141
          %144 = vsyncadd %s139, 0
          %s145 = smul.addr %s22, 2
          %s146 = sadd.s32 %s23, %s145
          %s147 = smul.addr %s146, 4
          %s148 = scalar_lea.hbm %s0, %s147
          %s150 = sshll.u32 %s148, 4
          %s151 = int_to_ptr.hbm [resolvable:$true] %s150
          %s152 = sshll.u32 %s142, 4
          %s153 = int_to_ptr.vmem [resolvable:$true] %s152
          %155 = dma.hbm_to_vmem [thread:$0]  %s151, 64, %s153, %s139
        $region24: #{tpu_custom_call.1} parent=19 // pred_fallthru
          _
      $region20: #{tpu_custom_call.1} parent=5 // pred_fallthru
        _
      %p156 = scmp.le.s32.totalorder 1, %s15
      %p157 = scmp.lt.s32.totalorder %s15, 5
      %p158 = pnand %p156, %p157
      %p159 = pneg %p158
      // Predicated region
      $region25: #{tpu_custom_call.1} parent=5 // pred_check
        _
      $region26: #{tpu_custom_call.1} parent=5 // pred_check_branch
        %161 = sbr.rel (%p158) target = $region28
      $region27: #{tpu_custom_call.1} parent=5 // pred_region
        %s162 = ssub.s32 %s15, 1
        %s163 = sand.u32 %s42, 1
        %s164 = scalar_lea.sflag [#allocation3], %s163
        %s165 = sand.u32 %s42, 1
        %s166 = smul.addr %s165, 4
        %s167 = scalar_lea.vmem [#allocation2], %s166
        // Predicated region
        $region29: #{tpu_custom_call.1} parent=27 // pred_check
          %p168 = pneg %p55
        $region30: #{tpu_custom_call.1} parent=27 // pred_check_branch
          %170 = sbr.rel (%p168) target = $region32
        $region31: #{tpu_custom_call.1} parent=27 // pred_region
          %172 = dma.done %s164, 64
        $region32: #{tpu_custom_call.1} parent=27 // pred_fallthru
          _
        // Predicated region
        $region33: #{tpu_custom_call.1} parent=27 // pred_check
          %p173 = pneg %p76
        $region34: #{tpu_custom_call.1} parent=27 // pred_check_branch
          %175 = sbr.rel (%p173) target = $region36
        $region35: #{tpu_custom_call.1} parent=27 // pred_region
          %177 = dma.done [#allocation6], 64
        $region36: #{tpu_custom_call.1} parent=27 // pred_fallthru
          _
        %s178 = sand.u32 %s42, 1
        %s179 = scalar_lea.sflag [#allocation3], %s178
        %s180 = sand.u32 %s42, 1
        %s181 = smul.addr %s180, 4
        %s182 = scalar_lea.vmem [#allocation2], %s181
        %p183 = pneg %p55
        %p184 = pneg %p52
        %p185 = pneg %p76
        %p186 = pneg %p73
        %p187 = pneg %p104
        %p188 = pneg %p101
        %s189 = sand.u32 %s91, 1
        %s190 = scalar_lea.sflag [#allocation4], %s189
        %s191 = sand.u32 %s91, 1
        %s192 = smul.addr %s191, 4
        %s193 = scalar_lea.vmem [#allocation7], %s192
        %v194 = vld [vmem:[%s167] sm:$0xf]
        %v195 = vld [vmem:[#allocation5] sm:$0xf]
        %197 = vset.pattern.permute.xlu0 0
        %198 = vperm.xlu0 %197, %v195
        %v199 = vpop.permute.xlu0 %198
        %v201 = vperm.slane %v194, 0
        %v202 = vmul.f32 %v199, %v201
        %203 = vset.pattern.permute.xlu0 1
        %204 = vperm.xlu0 %203, %v195
        %v205 = vpop.permute.xlu0 %204
        %v207 = vperm.slane %v194, 1
        %v208 = vmul.f32 %v205, %v207
        %v209 = vadd.f32 %v202, %v208
        %210 = vset.pattern.permute.xlu0 2
        %211 = vperm.xlu0 %210, %v195
        %v212 = vpop.permute.xlu0 %211
        %v214 = vperm.slane %v194, 2
        %v215 = vmul.f32 %v212, %v214
        %v216 = vadd.f32 %v209, %v215
        %217 = vset.pattern.permute.xlu0 3
        %218 = vperm.xlu0 %217, %v195
        %v219 = vpop.permute.xlu0 %218
        %v221 = vperm.slane %v194, 3
        %v222 = vmul.f32 %v219, %v221
        %v223 = vadd.f32 %v216, %v222
        %224 = vset.pattern.permute.xlu0 4
        %225 = vperm.xlu0 %224, %v195
        %v226 = vpop.permute.xlu0 %225
        %v228 = vadd.f32 %v223, %v226
        %v230 = vrot.slane %v228, 1
        %v232 = vadd.f32 %v228, %v230
        %v233 = vrot.slane %v228, 2
        %v235 = vadd.f32 %v232, %v233
        %v236 = vrot.slane %v228, 3
        %v238 = vadd.f32 %v235, %v236
        %v239 = vmul.f32 %v238, 0.25
        %v240 = vperm.slane %v239, 0
        %v241 = vsub.f32 %v228, %v240
        %v242 = vmul.f32 %v241, %v241
        %v244 = vrot.slane %v242, 1
        %v246 = vadd.f32 %v242, %v244
        %v247 = vrot.slane %v242, 2
        %v249 = vadd.f32 %v246, %v247
        %v250 = vrot.slane %v242, 3
        %v252 = vadd.f32 %v249, %v250
        %v253 = vmul.f32 %v252, 0.25
        %v254 = vadd.f32 %v253, 1e-06
        %v255 = vrsqrt.pop %v254
        %v256 = vmul.f32 %v255, %v254
        %v257 = vmul.f32 %v256, %v255
        %v258 = vmul.f32 0.5, %v257
        %v259 = vsub.f32 1.5, %v258
        %v260 = vmul.f32 %v255, %v259
        %vm261 = vweird.f32 %v254
        %vm262 = vweird.f32 %v255
        %vm263 = vmor %vm261, %vm262
        %v264 = vsel %vm263, %v255, %v260
        %v265 = vperm.slane %v264, 0
        %v266 = vmul.f32 %v241, %v265
        %267 = vset.pattern.permute.xlu0 5
        %268 = vperm.xlu0 %267, %v195
        %v269 = vpop.permute.xlu0 %268
        %v271 = vmul.f32 %v266, %v269
        %272 = vset.pattern.permute.xlu0 6
        %273 = vperm.xlu0 %272, %v195
        %v274 = vpop.permute.xlu0 %273
        %v276 = vadd.f32 %v271, %v274
        %277 = vst [vmem:[%s193] sm:$0xf] %v276
        %s278 = sand.u32 %s91, 1
        %s279 = scalar_lea.sflag [#allocation4], %s278
        %s280 = sand.u32 %s91, 1
        %s281 = smul.addr %s280, 4
        %s282 = scalar_lea.vmem [#allocation7], %s281
        // Predicated region
        $region37: #{tpu_custom_call.1} parent=27 // pred_check
          %p283 = pneg %p101
        $region38: #{tpu_custom_call.1} parent=27 // pred_check_branch
          %285 = sbr.rel (%p283) target = $region40
        $region39: #{tpu_custom_call.1} parent=27 // pred_region
          %287 = vsyncadd %s279, 0
          %s288 = smul.addr %s24, 2
          %s289 = sadd.s32 %s25, %s288
          %s290 = smul.addr %s289, 4
          %s291 = scalar_lea.hbm %s2, %s290
          %s293 = sshll.u32 %s282, 4
          %s294 = int_to_ptr.vmem [resolvable:$true] %s293
          %s295 = sshll.u32 %s291, 4
          %s296 = int_to_ptr.hbm [resolvable:$true] %s295
          %298 = dma.vmem_to_hbm [thread:$0]  %s294, 64, %s296, %s279
        $region40: #{tpu_custom_call.1} parent=27 // pred_fallthru
          _
      $region28: #{tpu_custom_call.1} parent=5 // pred_fallthru
        _
      %p299 = scmp.le.s32.totalorder 2, %s15
      // Predicated region
      $region41: #{tpu_custom_call.1} parent=5 // pred_check
        %p300 = pneg %p299
      $region42: #{tpu_custom_call.1} parent=5 // pred_check_branch
        %302 = sbr.rel (%p300) target = $region44
      $region43: #{tpu_custom_call.1} parent=5 // pred_region
        %s303 = ssub.s32 %s15, 2
        // Predicated region
        $region45: #{tpu_custom_call.1} parent=43 // pred_check
          %p304 = pneg %p107
        $region46: #{tpu_custom_call.1} parent=43 // pred_check_branch
          %306 = sbr.rel (%p304) target = $region48
        $region47: #{tpu_custom_call.1} parent=43 // pred_region
          %s307 = sand.u32 %s92, 1
          %s308 = scalar_lea.sflag [#allocation4], %s307
          %s309 = sand.u32 %s92, 1
          %s310 = smul.addr %s309, 4
          %s311 = scalar_lea.vmem [#allocation7], %s310
          %313 = dma.done %s308, 64
        $region48: #{tpu_custom_call.1} parent=43 // pred_fallthru
          _
      $region44: #{tpu_custom_call.1} parent=5 // pred_fallthru
        _
    $region6: #{tpu_custom_call.1} parent=1 // loop_footer
      %s19 = sadd.s32 1, %s15
    $region7: #{tpu_custom_call.1} parent=1 // loop_footer_branch
      %14 = sbr.rel target = $region3
    $region8: #{tpu_custom_call.1} parent=1 // loop_exit
      _
    %314 = vsyncpa [#allocation3], 1
    %s315 = scalar_lea.sflag [#allocation3], 1
    %316 = vsyncpa %s315, 1
    %317 = vsyncpa [#allocation6], 1
    %318 = vsyncpa [#allocation4], 1
    %s319 = scalar_lea.sflag [#allocation4], 1
    %320 = vsyncpa %s319, 1

</llo_original>
